<compile_context>
chip_gen: v5e
topology: v5e:2x2
jax: 0.10.0
libtpu: 0.0.40
codegen_flags: <defaults>
</compile_context>

<pallas_src>
import jax
import jax.numpy as jnp
import numpy as np
from jax.experimental import pallas as pl
from jax.experimental.pallas import tpu as pltpu

SIGMA = 1e-4          # FlowMatchingLoss(sigma=1e-4)
NUM_FLOWS = 2         # synthetic stand-in for the nn.ModuleList of flows
ROW_TILE = 512        # rows per block at realistic sizes (~85% of HBM roofline per tile sweep)


def _round_up(x, m):
    return (x + m - 1) // m * m


def _fm_loss_kernel(t_ref, x_ref, z_ref, mask_ref, w_ref, b_ref, tw_ref,
                    num_ref, den_ref):
    """One (TN, Dp) row tile of one batch element.

    t_ref    : (B,)           SMEM f32   per-batch-element time
    x_ref    : (TN, Dp)       VMEM f32
    z_ref    : (TN, Dp)       VMEM f32
    mask_ref : (TN, 1)        VMEM f32   per-row mask (0 for padded rows)
    w_ref    : (F, Dp, Dp)    VMEM bf16  resident across the whole grid
    b_ref    : (F, 1, Dp)     VMEM f32   per-flow bias
    tw_ref   : (F, 1, Dp)     VMEM f32   per-flow time-conditioning weight
    num_ref, den_ref : (1, 1, 8, 128) VMEM f32  per-tile partial sums (scalar splat)
    """
    bi = pl.program_id(0)
    t = t_ref[bi]                                   # scalar f32 from SMEM
    a_coef = 1.0 - t
    c_coef = SIGMA + (1.0 - SIGMA) * t

    x = x_ref[...]                                  # (TN, Dp) f32
    z = z_ref[...]
    mask = mask_ref[...]                            # (TN, 1)  f32

    # y = (1 - t) * x + (sigma + (1 - sigma) * t) * z
    y = a_coef * x + c_coef * z
    # u_t = ((1 - sigma) * z - x) * mask
    u_t = ((1.0 - SIGMA) * z - x) * mask

    # v_t = flows(t, y, mask, cond): each synthetic flow is
    #   temp <- (temp @ W_f + b_f + t * tw_f) * mask
    # TODO(synk): `cond` is accepted by the PyTorch API but unused by this synthetic flow
    # stack (the real flows are external modules supplied to __init__).
    temp = y
    for f in range(NUM_FLOWS):
        bias_f = b_ref[f] + t * tw_ref[f]           # (1, Dp), hoisted once per flow
        proj = jnp.dot(temp.astype(jnp.bfloat16), w_ref[f],
                       preferred_element_type=jnp.float32)
        temp = (proj + bias_f) * mask

    sqrd = (temp - u_t) ** 2
    num = jnp.sum(sqrd)                             # partial numerator for this tile
    den = jnp.sum(mask)                             # partial sum(mask) for this tile
    num_ref[...] = jnp.full(num_ref.shape, num, jnp.float32)
    den_ref[...] = jnp.full(den_ref.shape, den, jnp.float32)


@jax.jit
def flow_matching_loss(x, t_b, z, mask, flow_w, flow_b, flow_tw):
    """out = sum((v_t - u_t)^2) / sum(mask), with t_b of shape (B,)."""
    B, N, D = x.shape
    F = flow_w.shape[0]
    Dp = _round_up(D, 128)
    TN = min(ROW_TILE, _round_up(N, 8))
    Np = _round_up(N, TN)
    NT = Np // TN

    # Zero-pad feature dim (and params) + sequence dim. Padded rows are masked out;
    # padded columns stay exactly zero through the zero-padded W/b/tw, so the sums match.
    xp = jnp.pad(x, ((0, 0), (0, Np - N), (0, Dp - D))).reshape(B * Np, Dp)
    zp = jnp.pad(z, ((0, 0), (0, Np - N), (0, Dp - D))).reshape(B * Np, Dp)
    mp = jnp.pad(mask, ((0, 0), (0, Np - N), (0, 0))).reshape(B * Np, 1)
    wp = jnp.pad(flow_w, ((0, 0), (0, Dp - D), (0, Dp - D))).astype(jnp.bfloat16)
    bp = jnp.pad(flow_b.reshape(F, 1, D), ((0, 0), (0, 0), (0, Dp - D)))
    twp = jnp.pad(flow_tw.reshape(F, 1, D), ((0, 0), (0, 0), (0, Dp - D)))

    row_map = lambda b, j: (b * NT + j, 0)
    const3 = lambda b, j: (0, 0, 0)
    out_map = lambda b, j: (b, j, 0, 0)

    num_part, den_part = pl.pallas_call(
        _fm_loss_kernel,
        grid=(B, NT),
        in_specs=[
            pl.BlockSpec(memory_space=pltpu.MemorySpace.SMEM),   # t_b (B,)
            pl.BlockSpec((TN, Dp), row_map),                     # x rows
            pl.BlockSpec((TN, Dp), row_map),                     # z rows
            pl.BlockSpec((TN, 1), row_map),                      # mask rows
            pl.BlockSpec((F, Dp, Dp), const3),                   # flow weights (resident)
            pl.BlockSpec((F, 1, Dp), const3),                    # flow bias (resident)
            pl.BlockSpec((F, 1, Dp), const3),                    # flow time weight (resident)
        ],
        out_specs=(pl.BlockSpec((1, 1, 8, 128), out_map),
                   pl.BlockSpec((1, 1, 8, 128), out_map)),
        out_shape=(jax.ShapeDtypeStruct((B, NT, 8, 128), jnp.float32),
                   jax.ShapeDtypeStruct((B, NT, 8, 128), jnp.float32)),
        compiler_params=pltpu.CompilerParams(
            dimension_semantics=("parallel", "parallel"),
            vmem_limit_bytes=32 * 1024 * 1024),
    )(t_b, xp, zp, mp, wp, bp, twp)

    num = jnp.sum(num_part[:, :, 0, 0])
    den = jnp.sum(den_part[:, :, 0, 0])
    return num / den


def _reference_loss(x, t_b, z, mask, flow_w, flow_b, flow_tw):
    """Pure-JAX reference mirroring the PyTorch forward (bf16 matmul operands, f32 acc)."""
    t = t_b[:, None, None]
    y = (1.0 - t) * x + (SIGMA + (1.0 - SIGMA) * t) * z
    u_t = ((1.0 - SIGMA) * z - x) * mask
    temp = y
    for f in range(NUM_FLOWS):
        proj = jnp.einsum('bnd,de->bne', temp.astype(jnp.bfloat16),
                          flow_w[f].astype(jnp.bfloat16),
                          preferred_element_type=jnp.float32)
        temp = (proj + flow_b[f] + t * flow_tw[f]) * mask
    sqrd = (temp - u_t) ** 2
    return jnp.sum(sqrd) / jnp.sum(mask)


if __name__ == "__main__":
    B, N, D = 2, 8, 32
    key = jax.random.PRNGKey(0)
    kx, kt, kz, kw, kb, ktw = jax.random.split(key, 6)

    # Inputs (3-D path of FlowMatchingLoss.forward)
    x = jax.random.normal(kx, (B, N, D), dtype=jnp.float32)

    # t ~ U[0,1) per batch element (broadcast over the sequence dim happens in-kernel)
    t_b = jax.random.uniform(kt, (B,), dtype=jnp.float32)

    # z ~ N(0,1), same shape as x
    z = jax.random.normal(kz, (B, N, D), dtype=jnp.float32)

    # default mask: ones_like(x[..., 0]).unsqueeze(-1)
    mask = jnp.ones((B, N, 1), dtype=jnp.float32)

    # Deterministic synthetic flow parameters.
    flow_w = 0.1 * jax.random.normal(kw, (NUM_FLOWS, D, D), dtype=jnp.float32)
    flow_b = 0.01 * jax.random.normal(kb, (NUM_FLOWS, 1, 1, D), dtype=jnp.float32)
    flow_tw = 0.01 * jax.random.normal(ktw, (NUM_FLOWS, 1, 1, D), dtype=jnp.float32)

    loss = flow_matching_loss(x, t_b, z, mask, flow_w, flow_b, flow_tw)
    loss = jax.block_until_ready(loss)

    ref = _reference_loss(x, t_b, z, mask, flow_w, flow_b, flow_tw)
    np.testing.assert_allclose(np.asarray(loss), np.asarray(ref), rtol=3e-4, atol=1e-4)

    print("KERNEL_OK")
</pallas_src>

<mosaic_0001>
module attributes {stable_mosaic.version = 11 : i64} {
  func.func @_fm_loss_kernel(%arg0: i32, %arg1: i32, %arg2: memref<2xf32, #tpu.memory_space<smem>>, %arg3: memref<8x128xf32, #tpu.memory_space<vmem>>, %arg4: memref<8x128xf32, #tpu.memory_space<vmem>>, %arg5: memref<8x1xf32, #tpu.memory_space<vmem>>, %arg6: memref<2x128x128xbf16, #tpu.memory_space<vmem>>, %arg7: memref<2x1x128xf32, #tpu.memory_space<vmem>>, %arg8: memref<2x1x128xf32, #tpu.memory_space<vmem>>, %arg9: memref<1x1x8x128xf32, #tpu.memory_space<vmem>>, %arg10: memref<1x1x8x128xf32, #tpu.memory_space<vmem>>) attributes {dimension_semantics = [#tpu.dimension_semantics<parallel>, #tpu.dimension_semantics<parallel>], iteration_bounds = array<i64: 2, 1>, scalar_prefetch = 0 : i64, scratch_operands = 0 : i64, tpu.core_type = #tpu.core_type<tc>, window_params = [{transform_indices = @transform_0, window_bounds = array<i64: 2>}, {transform_indices = @transform_1, window_bounds = array<i64: 8, 128>}, {transform_indices = @transform_2, window_bounds = array<i64: 8, 128>}, {transform_indices = @transform_3, window_bounds = array<i64: 8, 1>}, {pipeline_mode = #tpu.pipeline_mode<synchronous>, transform_indices = @transform_4, window_bounds = array<i64: 2, 128, 128>}, {pipeline_mode = #tpu.pipeline_mode<synchronous>, transform_indices = @transform_5, window_bounds = array<i64: 2, 1, 128>}, {pipeline_mode = #tpu.pipeline_mode<synchronous>, transform_indices = @transform_6, window_bounds = array<i64: 2, 1, 128>}, {transform_indices = @transform_7, window_bounds = array<i64: 1, 1, 8, 128>}, {transform_indices = @transform_8, window_bounds = array<i64: 1, 1, 8, 128>}]} {
    %0 = arith.index_cast %arg0 : i32 to index
    %1 = memref.load %arg2[%0] : memref<2xf32, #tpu.memory_space<smem>>
    %cst = arith.constant 1.000000e+00 : f32
    %2 = arith.subf %cst, %1 : f32
    %cst_0 = arith.constant 0.999899983 : f32
    %3 = arith.mulf %cst_0, %1 : f32
    %cst_1 = arith.constant 9.99999974E-5 : f32
    %4 = arith.addf %cst_1, %3 : f32
    %c0 = arith.constant 0 : index
    %c0_2 = arith.constant 0 : index
    %5 = vector.load %arg3[%c0, %c0_2] : memref<8x128xf32, #tpu.memory_space<vmem>>, vector<8x128xf32>
    %c0_3 = arith.constant 0 : index
    %c0_4 = arith.constant 0 : index
    %6 = vector.load %arg4[%c0_3, %c0_4] : memref<8x128xf32, #tpu.memory_space<vmem>>, vector<8x128xf32>
    %c0_5 = arith.constant 0 : index
    %c0_6 = arith.constant 0 : index
    %7 = vector.load %arg5[%c0_5, %c0_6] : memref<8x1xf32, #tpu.memory_space<vmem>>, vector<8x1xf32>
    %8 = vector.broadcast %2 : f32 to vector<8x128xf32>
    %9 = arith.mulf %8, %5 : vector<8x128xf32>
    %10 = vector.broadcast %4 : f32 to vector<8x128xf32>
    %11 = arith.mulf %10, %6 : vector<8x128xf32>
    %12 = arith.addf %9, %11 : vector<8x128xf32>
    %cst_7 = arith.constant 0.999899983 : f32
    %13 = vector.broadcast %cst_7 : f32 to vector<8x128xf32>
    %14 = arith.mulf %13, %6 : vector<8x128xf32>
    %15 = arith.subf %14, %5 : vector<8x128xf32>
    %16 = vector.broadcast %7 : vector<8x1xf32> to vector<8x128xf32>
    %17 = arith.mulf %15, %16 : vector<8x128xf32>
    %c0_8 = arith.constant 0 : index
    %c0_9 = arith.constant 0 : index
    %c0_10 = arith.constant 0 : index
    %18 = vector.load %arg7[%c0_8, %c0_9, %c0_10] : memref<2x1x128xf32, #tpu.memory_space<vmem>>, vector<1x1x128xf32>
    %19 = vector.shape_cast %18 : vector<1x1x128xf32> to vector<1x128xf32>
    %c0_11 = arith.constant 0 : index
    %c0_12 = arith.constant 0 : index
    %c0_13 = arith.constant 0 : index
    %20 = vector.load %arg8[%c0_11, %c0_12, %c0_13] : memref<2x1x128xf32, #tpu.memory_space<vmem>>, vector<1x1x128xf32>
    %21 = vector.shape_cast %20 : vector<1x1x128xf32> to vector<1x128xf32>
    %22 = vector.broadcast %1 : f32 to vector<1x128xf32>
    %23 = arith.mulf %22, %21 : vector<1x128xf32>
    %24 = arith.addf %19, %23 : vector<1x128xf32>
    %25 = arith.truncf %12 : vector<8x128xf32> to vector<8x128xbf16>
    %c0_14 = arith.constant 0 : index
    %c0_15 = arith.constant 0 : index
    %c0_16 = arith.constant 0 : index
    %26 = vector.load %arg6[%c0_14, %c0_15, %c0_16] : memref<2x128x128xbf16, #tpu.memory_space<vmem>>, vector<1x128x128xbf16>
    %27 = vector.shape_cast %26 : vector<1x128x128xbf16> to vector<128x128xbf16>
    %cst_17 = arith.constant dense<0.000000e+00> : vector<8x128xf32>
    %28 = tpu.matmul %25, %27, %cst_17 {dimension_numbers = #tpu.dot_dimension_numbers<[1], [0], [0], [1], [0, 0, 1, 1], [], []>} : vector<8x128xbf16>, vector<128x128xbf16>, vector<8x128xf32> -> vector<8x128xf32>
    %29 = vector.broadcast %24 : vector<1x128xf32> to vector<8x128xf32>
    %30 = arith.addf %28, %29 : vector<8x128xf32>
    %31 = vector.broadcast %7 : vector<8x1xf32> to vector<8x128xf32>
    %32 = arith.mulf %30, %31 : vector<8x128xf32>
    %c1 = arith.constant 1 : index
    %c0_18 = arith.constant 0 : index
    %c0_19 = arith.constant 0 : index
    %33 = vector.load %arg7[%c1, %c0_18, %c0_19] : memref<2x1x128xf32, #tpu.memory_space<vmem>>, vector<1x1x128xf32>
    %34 = vector.shape_cast %33 : vector<1x1x128xf32> to vector<1x128xf32>
    %c1_20 = arith.constant 1 : index
    %c0_21 = arith.constant 0 : index
    %c0_22 = arith.constant 0 : index
    %35 = vector.load %arg8[%c1_20, %c0_21, %c0_22] : memref<2x1x128xf32, #tpu.memory_space<vmem>>, vector<1x1x128xf32>
    %36 = vector.shape_cast %35 : vector<1x1x128xf32> to vector<1x128xf32>
    %37 = vector.broadcast %1 : f32 to vector<1x128xf32>
    %38 = arith.mulf %37, %36 : vector<1x128xf32>
    %39 = arith.addf %34, %38 : vector<1x128xf32>
    %40 = arith.truncf %32 : vector<8x128xf32> to vector<8x128xbf16>
    %c1_23 = arith.constant 1 : index
    %c0_24 = arith.constant 0 : index
    %c0_25 = arith.constant 0 : index
    %41 = vector.load %arg6[%c1_23, %c0_24, %c0_25] : memref<2x128x128xbf16, #tpu.memory_space<vmem>>, vector<1x128x128xbf16>
    %42 = vector.shape_cast %41 : vector<1x128x128xbf16> to vector<128x128xbf16>
    %cst_26 = arith.constant dense<0.000000e+00> : vector<8x128xf32>
    %43 = tpu.matmul %40, %42, %cst_26 {dimension_numbers = #tpu.dot_dimension_numbers<[1], [0], [0], [1], [0, 0, 1, 1], [], []>} : vector<8x128xbf16>, vector<128x128xbf16>, vector<8x128xf32> -> vector<8x128xf32>
    %44 = vector.broadcast %39 : vector<1x128xf32> to vector<8x128xf32>
    %45 = arith.addf %43, %44 : vector<8x128xf32>
    %46 = vector.broadcast %7 : vector<8x1xf32> to vector<8x128xf32>
    %47 = arith.mulf %45, %46 : vector<8x128xf32>
    %48 = arith.subf %47, %17 : vector<8x128xf32>
    %49 = arith.mulf %48, %48 : vector<8x128xf32>
    %50 = vector.shape_cast %49 : vector<8x128xf32> to vector<1x8x128xf32>
    %cst_27 = arith.constant dense<0.000000e+00> : vector<1xf32>
    %51 = vector.multi_reduction <add>, %50, %cst_27 [1, 2] : vector<1x8x128xf32> to vector<1xf32>
    %52 = vector.shape_cast %51 : vector<1xf32> to vector<1x1x1xf32>
    %53 = vector.extract %52[0, 0, 0] : f32 from vector<1x1x1xf32>
    %54 = vector.shape_cast %7 : vector<8x1xf32> to vector<1x8x1xf32>
    %cst_28 = arith.constant dense<0.000000e+00> : vector<1xf32>
    %55 = vector.multi_reduction <add>, %54, %cst_28 [1, 2] : vector<1x8x1xf32> to vector<1xf32>
    %56 = vector.shape_cast %55 : vector<1xf32> to vector<1x1x1xf32>
    %57 = vector.extract %56[0, 0, 0] : f32 from vector<1x1x1xf32>
    %58 = vector.broadcast %53 : f32 to vector<1x1x8x128xf32>
    %c0_29 = arith.constant 0 : index
    %c0_30 = arith.constant 0 : index
    %c0_31 = arith.constant 0 : index
    %c0_32 = arith.constant 0 : index
    %59 = vector.load %arg9[%c0_29, %c0_30, %c0_31, %c0_32] : memref<1x1x8x128xf32, #tpu.memory_space<vmem>>, vector<1x1x8x128xf32>
    tpu.vector_store %arg9[%c0_29, %c0_30, %c0_31, %c0_32], %58 {strides = array<i32>} : memref<1x1x8x128xf32, #tpu.memory_space<vmem>>, vector<1x1x8x128xf32>,
    %60 = vector.broadcast %57 : f32 to vector<1x1x8x128xf32>
    %c0_33 = arith.constant 0 : index
    %c0_34 = arith.constant 0 : index
    %c0_35 = arith.constant 0 : index
    %c0_36 = arith.constant 0 : index
    %61 = vector.load %arg10[%c0_33, %c0_34, %c0_35, %c0_36] : memref<1x1x8x128xf32, #tpu.memory_space<vmem>>, vector<1x1x8x128xf32>
    tpu.vector_store %arg10[%c0_33, %c0_34, %c0_35, %c0_36], %60 {strides = array<i32>} : memref<1x1x8x128xf32, #tpu.memory_space<vmem>>, vector<1x1x8x128xf32>,
    return
  }
  func.func @transform_0(%arg0: i32, %arg1: i32) -> i32 {
    %c0_i32 = arith.constant 0 : i32
    %c0_i32_0 = arith.constant 0 : i32
    return %c0_i32 : i32
  }
  func.func @transform_1(%arg0: i32, %arg1: i32) -> (i32, i32) {
    %c1_i32 = arith.constant 1 : i32
    %0 = arith.muli %arg0, %c1_i32 : i32
    %1 = arith.addi %0, %arg1 : i32
    %c0_i32 = arith.constant 0 : i32
    %c0_i32_0 = arith.constant 0 : i32
    return %1, %c0_i32 : i32, i32
  }
  func.func @transform_2(%arg0: i32, %arg1: i32) -> (i32, i32) {
    %c1_i32 = arith.constant 1 : i32
    %0 = arith.muli %arg0, %c1_i32 : i32
    %1 = arith.addi %0, %arg1 : i32
    %c0_i32 = arith.constant 0 : i32
    %c0_i32_0 = arith.constant 0 : i32
    return %1, %c0_i32 : i32, i32
  }
  func.func @transform_3(%arg0: i32, %arg1: i32) -> (i32, i32) {
    %c1_i32 = arith.constant 1 : i32
    %0 = arith.muli %arg0, %c1_i32 : i32
    %1 = arith.addi %0, %arg1 : i32
    %c0_i32 = arith.constant 0 : i32
    %c0_i32_0 = arith.constant 0 : i32
    return %1, %c0_i32 : i32, i32
  }
  func.func @transform_4(%arg0: i32, %arg1: i32) -> (i32, i32, i32) {
    %c0_i32 = arith.constant 0 : i32
    %c0_i32_0 = arith.constant 0 : i32
    %c0_i32_1 = arith.constant 0 : i32
    %c0_i32_2 = arith.constant 0 : i32
    return %c0_i32, %c0_i32_0, %c0_i32_1 : i32, i32, i32
  }
  func.func @transform_5(%arg0: i32, %arg1: i32) -> (i32, i32, i32) {
    %c0_i32 = arith.constant 0 : i32
    %c0_i32_0 = arith.constant 0 : i32
    %c0_i32_1 = arith.constant 0 : i32
    %c0_i32_2 = arith.constant 0 : i32
    return %c0_i32, %c0_i32_0, %c0_i32_1 : i32, i32, i32
  }
  func.func @transform_6(%arg0: i32, %arg1: i32) -> (i32, i32, i32) {
    %c0_i32 = arith.constant 0 : i32
    %c0_i32_0 = arith.constant 0 : i32
    %c0_i32_1 = arith.constant 0 : i32
    %c0_i32_2 = arith.constant 0 : i32
    return %c0_i32, %c0_i32_0, %c0_i32_1 : i32, i32, i32
  }
  func.func @transform_7(%arg0: i32, %arg1: i32) -> (i32, i32, i32, i32) {
    %c0_i32 = arith.constant 0 : i32
    %c0_i32_0 = arith.constant 0 : i32
    %c0_i32_1 = arith.constant 0 : i32
    return %arg0, %arg1, %c0_i32, %c0_i32_0 : i32, i32, i32, i32
  }
  func.func @transform_8(%arg0: i32, %arg1: i32) -> (i32, i32, i32, i32) {
    %c0_i32 = arith.constant 0 : i32
    %c0_i32_0 = arith.constant 0 : i32
    %c0_i32_1 = arith.constant 0 : i32
    return %arg0, %arg1, %c0_i32, %c0_i32_0 : i32, i32, i32, i32
  }
}

</mosaic_0001>

<llo_original>
// kernel: flow_matching_loss.1
$region0: #{flow_matching_loss.1}
  #allocation0 [shape = 'u32[]', space=smem, size = 0x4, offset = 0x4, fixed_abs, tag = 'smem constant byte address 0x4 - core index']
  #allocation1 [shape = 'u32[72,128]{1,0:T(1,128)}', space=vmem, size = 0x9000, scoped, tag = 'internal scratch']
  %s0 = inlined_call_operand.vmem [shape: f32[2], index: 0, kind: input, shape index: {}]
  %s1 = inlined_call_operand.vmem [shape: f32[16,128], index: 1, kind: input, shape index: {}]
  %s2 = inlined_call_operand.vmem [shape: f32[16,128], index: 2, kind: input, shape index: {}]
  %s3 = inlined_call_operand.vmem [shape: f32[16,1], index: 3, kind: input, shape index: {}]
  %s4 = inlined_call_operand.vmem [shape: bf16[2,128,128], index: 4, kind: input, shape index: {}]
  %s5 = inlined_call_operand.vmem [shape: f32[2,1,128], index: 5, kind: input, shape index: {}]
  %s6 = inlined_call_operand.vmem [shape: f32[2,1,128], index: 6, kind: input, shape index: {}]
  %s7 = inlined_call_operand.vmem [shape: f32[2,1,8,128], index: 7, kind: output, shape index: {0}]
  %s8 = inlined_call_operand.vmem [shape: f32[2,1,8,128], index: 8, kind: output, shape index: {1}]
  %9 = xla_tuple %s7, %s8
  %s10 = sld [smem:[#allocation0]]
  $region73: #{flow_matching_loss.1} parent=0
    _
  %s12 = ssub.s32 1, %s10
  %s13 = scalar_select 0, %s12, %s10
  $region1: #{flow_matching_loss.1} parent=0
    #allocation2 [shape = 'u8[512]{0}', space=smem, size = 0x200, scoped, tag = 'input window, operand 0, single buffered']
    #allocation3 [shape = 's32[2]{0}', space=sflag, size = 0x8, scoped, tag = 'scoped memory for flow_matching_loss.1']
    %14 = vsyncpa [#allocation3], 0
    loop: start=0, step=1, limit=4
    $region2: #{flow_matching_loss.1} parent=1 // loop_pre_header
      _
    $region3: #{flow_matching_loss.1} parent=1 // loop_header
      %s16 = sphi 0, %s20
      %p17 = scmp.ge.s32.totalorder %s16, 4
      %s23 = sphi 0, %s35
      %s24 = sphi 0, %s31
      %s25 = sphi 0, %s23
      %s26 = sphi 0, %s24
      %s27 = sphi 0, %s25
      %s28 = sphi 0, %s26
      %s36 = sphi 0, %s36
      %s38 = sphi 0, %s36
      %s39 = sphi 0, %s38
      %s53 = sphi 0, %s39
      %s61 = sphi 0, %s63
      %s64 = sphi 0, %s61
      %s65 = sphi 0, %s64
      %s81 = sphi 0, %s65
      %s89 = sphi 0, %s91
      %s92 = sphi 0, %s89
      %s93 = sphi 0, %s92
      %s109 = sphi 0, %s93
      %s117 = sphi 0, %s119
      %s120 = sphi 0, %s117
      %s121 = sphi 0, %s120
      %s137 = sphi 0, %s121
      %s141 = sphi 0, %s141
      %s143 = sphi 0, %s141
      %s144 = sphi 0, %s143
      %s158 = sphi 0, %s144
      %s162 = sphi 0, %s162
      %s164 = sphi 0, %s162
      %s165 = sphi 0, %s164
      %s179 = sphi 0, %s165
      %s183 = sphi 0, %s183
      %s185 = sphi 0, %s183
      %s186 = sphi 0, %s185
      %s200 = sphi 0, %s186
      %s208 = sphi 0, %s210
      %s211 = sphi 0, %s208
      %s212 = sphi 0, %s211
      %s228 = sphi 0, %s212
      %s236 = sphi 0, %s238
      %s239 = sphi 0, %s236
      %s240 = sphi 0, %s239
      %s256 = sphi 0, %s240
    $region4: #{flow_matching_loss.1} parent=1 // loop_header_branch
      %19 = sbr.rel (%p17) target = $region8
    $region5: #{flow_matching_loss.1} parent=1 // loop_body
      %s21 = ssub.s32 %s16, 1
      %s22 = ssub.s32 %s16, 2
      %s29 = sadd.s32 1, %s24
      %p30 = scmp.ge.s32.totalorder %s29, 1
      %s31 = scalar_select %p30, 0, %s29
      %s32 = sadd.s32 1, %s23
      %s33 = scalar_select %p30, %s32, %s23
      %p34 = scmp.ge.s32.totalorder %s33, 2
      %s35 = scalar_select %p34, 0, %s33
      %s37 = sadd.s32 %s36, 1
      %p40 = scmp.eq.s32.totalorder %s16, 1
      %p41 = scmp.ne.s32.totalorder %s36, %s38
      %p42 = scmp.eq.s32.totalorder %s16, 0
      %p43 = por %p41, %p42
      %p44 = scmp.ne.s32.totalorder %s36, %s38
      %p45 = scmp.eq.s32.totalorder %s21, 1
      %p46 = por %p44, %p45
      %p47 = scmp.ne.s32.totalorder %s38, %s39
      %p48 = scmp.eq.s32.totalorder %s21, 0
      %p49 = por %p47, %p48
      %p50 = scmp.ne.s32.totalorder %s38, %s39
      %p51 = scmp.eq.s32.totalorder %s22, 1
      %p52 = por %p50, %p51
      %p54 = scmp.ne.s32.totalorder %s39, %s53
      %p55 = scmp.eq.s32.totalorder %s22, 0
      %p56 = por %p54, %p55
      %s57 = sadd.s32 %s23, %s24
      %s58 = sadd.s32 %s35, %s31
      %s59 = ssub.s32 %s57, %s58
      %p60 = scmp.eq.s32.totalorder %s59, 0
      %s62 = sadd.s32 %s61, 1
      %s63 = scalar_select %p60, %s61, %s62
      %p66 = pneg %p60
      %p67 = scmp.eq.s32.totalorder %s16, 1
      %p68 = por %p66, %p67
      %p69 = scmp.ne.s32.totalorder %s61, %s64
      %p70 = scmp.eq.s32.totalorder %s16, 0
      %p71 = por %p69, %p70
      %p72 = scmp.ne.s32.totalorder %s61, %s64
      %p73 = scmp.eq.s32.totalorder %s21, 1
      %p74 = por %p72, %p73
      %p75 = scmp.ne.s32.totalorder %s64, %s65
      %p76 = scmp.eq.s32.totalorder %s21, 0
      %p77 = por %p75, %p76
      %p78 = scmp.ne.s32.totalorder %s64, %s65
      %p79 = scmp.eq.s32.totalorder %s22, 1
      %p80 = por %p78, %p79
      %p82 = scmp.ne.s32.totalorder %s65, %s81
      %p83 = scmp.eq.s32.totalorder %s22, 0
      %p84 = por %p82, %p83
      %s85 = sadd.s32 %s23, %s24
      %s86 = sadd.s32 %s35, %s31
      %s87 = ssub.s32 %s85, %s86
      %p88 = scmp.eq.s32.totalorder %s87, 0
      %s90 = sadd.s32 %s89, 1
      %s91 = scalar_select %p88, %s89, %s90
      %p94 = pneg %p88
      %p95 = scmp.eq.s32.totalorder %s16, 1
      %p96 = por %p94, %p95
      %p97 = scmp.ne.s32.totalorder %s89, %s92
      %p98 = scmp.eq.s32.totalorder %s16, 0
      %p99 = por %p97, %p98
      %p100 = scmp.ne.s32.totalorder %s89, %s92
      %p101 = scmp.eq.s32.totalorder %s21, 1
      %p102 = por %p100, %p101
      %p103 = scmp.ne.s32.totalorder %s92, %s93
      %p104 = scmp.eq.s32.totalorder %s21, 0
      %p105 = por %p103, %p104
      %p106 = scmp.ne.s32.totalorder %s92, %s93
      %p107 = scmp.eq.s32.totalorder %s22, 1
      %p108 = por %p106, %p107
      %p110 = scmp.ne.s32.totalorder %s93, %s109
      %p111 = scmp.eq.s32.totalorder %s22, 0
      %p112 = por %p110, %p111
      %s113 = sadd.s32 %s23, %s24
      %s114 = sadd.s32 %s35, %s31
      %s115 = ssub.s32 %s113, %s114
      %p116 = scmp.eq.s32.totalorder %s115, 0
      %s118 = sadd.s32 %s117, 1
      %s119 = scalar_select %p116, %s117, %s118
      %p122 = pneg %p116
      %p123 = scmp.eq.s32.totalorder %s16, 1
      %p124 = por %p122, %p123
      %p125 = scmp.ne.s32.totalorder %s117, %s120
      %p126 = scmp.eq.s32.totalorder %s16, 0
      %p127 = por %p125, %p126
      %p128 = scmp.ne.s32.totalorder %s117, %s120
      %p129 = scmp.eq.s32.totalorder %s21, 1
      %p130 = por %p128, %p129
      %p131 = scmp.ne.s32.totalorder %s120, %s121
      %p132 = scmp.eq.s32.totalorder %s21, 0
      %p133 = por %p131, %p132
      %p134 = scmp.ne.s32.totalorder %s120, %s121
      %p135 = scmp.eq.s32.totalorder %s22, 1
      %p136 = por %p134, %p135
      %p138 = scmp.ne.s32.totalorder %s121, %s137
      %p139 = scmp.eq.s32.totalorder %s22, 0
      %p140 = por %p138, %p139
      %s142 = sadd.s32 %s141, 1
      %p145 = scmp.eq.s32.totalorder %s16, 1
      %p146 = scmp.ne.s32.totalorder %s141, %s143
      %p147 = scmp.eq.s32.totalorder %s16, 0
      %p148 = por %p146, %p147
      %p149 = scmp.ne.s32.totalorder %s141, %s143
      %p150 = scmp.eq.s32.totalorder %s21, 1
      %p151 = por %p149, %p150
      %p152 = scmp.ne.s32.totalorder %s143, %s144
      %p153 = scmp.eq.s32.totalorder %s21, 0
      %p154 = por %p152, %p153
      %p155 = scmp.ne.s32.totalorder %s143, %s144
      %p156 = scmp.eq.s32.totalorder %s22, 1
      %p157 = por %p155, %p156
      %p159 = scmp.ne.s32.totalorder %s144, %s158
      %p160 = scmp.eq.s32.totalorder %s22, 0
      %p161 = por %p159, %p160
      %s163 = sadd.s32 %s162, 1
      %p166 = scmp.eq.s32.totalorder %s16, 1
      %p167 = scmp.ne.s32.totalorder %s162, %s164
      %p168 = scmp.eq.s32.totalorder %s16, 0
      %p169 = por %p167, %p168
      %p170 = scmp.ne.s32.totalorder %s162, %s164
      %p171 = scmp.eq.s32.totalorder %s21, 1
      %p172 = por %p170, %p171
      %p173 = scmp.ne.s32.totalorder %s164, %s165
      %p174 = scmp.eq.s32.totalorder %s21, 0
      %p175 = por %p173, %p174
      %p176 = scmp.ne.s32.totalorder %s164, %s165
      %p177 = scmp.eq.s32.totalorder %s22, 1
      %p178 = por %p176, %p177
      %p180 = scmp.ne.s32.totalorder %s165, %s179
      %p181 = scmp.eq.s32.totalorder %s22, 0
      %p182 = por %p180, %p181
      %s184 = sadd.s32 %s183, 1
      %p187 = scmp.eq.s32.totalorder %s16, 1
      %p188 = scmp.ne.s32.totalorder %s183, %s185
      %p189 = scmp.eq.s32.totalorder %s16, 0
      %p190 = por %p188, %p189
      %p191 = scmp.ne.s32.totalorder %s183, %s185
      %p192 = scmp.eq.s32.totalorder %s21, 1
      %p193 = por %p191, %p192
      %p194 = scmp.ne.s32.totalorder %s185, %s186
      %p195 = scmp.eq.s32.totalorder %s21, 0
      %p196 = por %p194, %p195
      %p197 = scmp.ne.s32.totalorder %s185, %s186
      %p198 = scmp.eq.s32.totalorder %s22, 1
      %p199 = por %p197, %p198
      %p201 = scmp.ne.s32.totalorder %s186, %s200
      %p202 = scmp.eq.s32.totalorder %s22, 0
      %p203 = por %p201, %p202
      %s204 = ssub.s32 %s23, %s35
      %s205 = ssub.s32 %s24, %s31
      %s206 = sor.u32 %s204, %s205
      %p207 = scmp.eq.s32.totalorder %s206, 0
      %s209 = sadd.s32 %s208, 1
      %s210 = scalar_select %p207, %s208, %s209
      %p213 = pneg %p207
      %p214 = scmp.eq.s32.totalorder %s16, 1
      %p215 = por %p213, %p214
      %p216 = scmp.ne.s32.totalorder %s208, %s211
      %p217 = scmp.eq.s32.totalorder %s16, 0
      %p218 = por %p216, %p217
      %p219 = scmp.ne.s32.totalorder %s208, %s211
      %p220 = scmp.eq.s32.totalorder %s21, 1
      %p221 = por %p219, %p220
      %p222 = scmp.ne.s32.totalorder %s211, %s212
      %p223 = scmp.eq.s32.totalorder %s21, 0
      %p224 = por %p222, %p223
      %p225 = scmp.ne.s32.totalorder %s211, %s212
      %p226 = scmp.eq.s32.totalorder %s22, 1
      %p227 = por %p225, %p226
      %p229 = scmp.ne.s32.totalorder %s212, %s228
      %p230 = scmp.eq.s32.totalorder %s22, 0
      %p231 = por %p229, %p230
      %s232 = ssub.s32 %s23, %s35
      %s233 = ssub.s32 %s24, %s31
      %s234 = sor.u32 %s232, %s233
      %p235 = scmp.eq.s32.totalorder %s234, 0
      %s237 = sadd.s32 %s236, 1
      %s238 = scalar_select %p235, %s236, %s237
      %p241 = pneg %p235
      %p242 = scmp.eq.s32.totalorder %s16, 1
      %p243 = por %p241, %p242
      %p244 = scmp.ne.s32.totalorder %s236, %s239
      %p245 = scmp.eq.s32.totalorder %s16, 0
      %p246 = por %p244, %p245
      %p247 = scmp.ne.s32.totalorder %s236, %s239
      %p248 = scmp.eq.s32.totalorder %s21, 1
      %p249 = por %p247, %p248
      %p250 = scmp.ne.s32.totalorder %s239, %s240
      %p251 = scmp.eq.s32.totalorder %s21, 0
      %p252 = por %p250, %p251
      %p253 = scmp.ne.s32.totalorder %s239, %s240
      %p254 = scmp.eq.s32.totalorder %s22, 1
      %p255 = por %p253, %p254
      %p257 = scmp.ne.s32.totalorder %s240, %s256
      %p258 = scmp.eq.s32.totalorder %s22, 0
      %p259 = por %p257, %p258
      %p260 = scmp.le.s32.totalorder 1, %s16
      %p261 = scmp.lt.s32.totalorder %s16, 3
      %p262 = pnand %p260, %p261
      %p263 = pneg %p262
      // Predicated region
      $region9: #{flow_matching_loss.1} parent=5 // pred_check
        _
      $region10: #{flow_matching_loss.1} parent=5 // pred_check_branch
        %265 = sbr.rel (%p262) target = $region12
      $region11: #{flow_matching_loss.1} parent=5 // pred_region
        %s266 = ssub.s32 %s16, 1
        // Predicated region
        $region13: #{flow_matching_loss.1} parent=11 // pred_check
          %p267 = pneg %p49
        $region14: #{flow_matching_loss.1} parent=11 // pred_check_branch
          %269 = sbr.rel (%p267) target = $region16
        $region15: #{flow_matching_loss.1} parent=11 // pred_region
          %271 = vsyncadd [#allocation3], 0
          %s273 = sshll.u32 %s0, 4
          %s274 = int_to_ptr.vmem [resolvable:$true] %s273
          %276 = dma.vmem_to_smem %s274, 16, [#allocation2], [#allocation3]
        $region16: #{flow_matching_loss.1} parent=11 // pred_fallthru
          _
        // Predicated region
        $region17: #{flow_matching_loss.1} parent=11 // pred_check
          %p277 = pneg %p154
        $region18: #{flow_matching_loss.1} parent=11 // pred_check_branch
          %279 = sbr.rel (%p277) target = $region20
        $region19: #{flow_matching_loss.1} parent=11 // pred_region
          _
        $region20: #{flow_matching_loss.1} parent=11 // pred_fallthru
          _
        // Predicated region
        $region21: #{flow_matching_loss.1} parent=11 // pred_check
          %p280 = pneg %p175
        $region22: #{flow_matching_loss.1} parent=11 // pred_check_branch
          %282 = sbr.rel (%p280) target = $region24
        $region23: #{flow_matching_loss.1} parent=11 // pred_region
          _
        $region24: #{flow_matching_loss.1} parent=11 // pred_fallthru
          _
        // Predicated region
        $region25: #{flow_matching_loss.1} parent=11 // pred_check
          %p283 = pneg %p196
        $region26: #{flow_matching_loss.1} parent=11 // pred_check_branch
          %285 = sbr.rel (%p283) target = $region28
        $region27: #{flow_matching_loss.1} parent=11 // pred_region
          _
        $region28: #{flow_matching_loss.1} parent=11 // pred_fallthru
          _
      $region12: #{flow_matching_loss.1} parent=5 // pred_fallthru
        _
      %p286 = scmp.lt.s32.totalorder %s16, 2
      // Predicated region
      $region29: #{flow_matching_loss.1} parent=5 // pred_check
        %p287 = pneg %p286
      $region30: #{flow_matching_loss.1} parent=5 // pred_check_branch
        %289 = sbr.rel (%p287) target = $region32
      $region31: #{flow_matching_loss.1} parent=5 // pred_region
        // Predicated region
        $region33: #{flow_matching_loss.1} parent=31 // pred_check
          %p290 = pneg %p71
        $region34: #{flow_matching_loss.1} parent=31 // pred_check_branch
          %292 = sbr.rel (%p290) target = $region36
        $region35: #{flow_matching_loss.1} parent=31 // pred_region
          %s293 = sadd.s32 %s23, %s24
          %p294 = scmp.lt.s32.totalorder %s293, 1
          %s295 = scalar_select %p294, %s293, 1
          %s296 = smul.addr %s295, 8
          %s297 = scalar_lea.vmem %s1, %s296
          %s298 = sadd.s32 %s23, %s24
        $region36: #{flow_matching_loss.1} parent=31 // pred_fallthru
          _
        // Predicated region
        $region37: #{flow_matching_loss.1} parent=31 // pred_check
          %p299 = pneg %p99
        $region38: #{flow_matching_loss.1} parent=31 // pred_check_branch
          %301 = sbr.rel (%p299) target = $region40
        $region39: #{flow_matching_loss.1} parent=31 // pred_region
          %s302 = sadd.s32 %s23, %s24
          %p303 = scmp.lt.s32.totalorder %s302, 1
          %s304 = scalar_select %p303, %s302, 1
          %s305 = smul.addr %s304, 8
          %s306 = scalar_lea.vmem %s2, %s305
          %s307 = sadd.s32 %s23, %s24
        $region40: #{flow_matching_loss.1} parent=31 // pred_fallthru
          _
        // Predicated region
        $region41: #{flow_matching_loss.1} parent=31 // pred_check
          %p308 = pneg %p127
        $region42: #{flow_matching_loss.1} parent=31 // pred_check_branch
          %310 = sbr.rel (%p308) target = $region44
        $region43: #{flow_matching_loss.1} parent=31 // pred_region
          %s311 = sadd.s32 %s23, %s24
          %p312 = scmp.lt.s32.totalorder %s311, 1
          %s313 = scalar_select %p312, %s311, 1
          %s314 = smul.addr %s313, 8
          %s315 = scalar_lea.vmem %s3, %s314
          %s316 = sadd.s32 %s23, %s24
        $region44: #{flow_matching_loss.1} parent=31 // pred_fallthru
          _
      $region32: #{flow_matching_loss.1} parent=5 // pred_fallthru
        _
      %p317 = scmp.le.s32.totalorder 1, %s16
      %p318 = scmp.lt.s32.totalorder %s16, 3
      %p319 = pnand %p317, %p318
      %p320 = pneg %p319
      // Predicated region
      $region45: #{flow_matching_loss.1} parent=5 // pred_check
        _
      $region46: #{flow_matching_loss.1} parent=5 // pred_check_branch
        %322 = sbr.rel (%p319) target = $region48
      $region47: #{flow_matching_loss.1} parent=5 // pred_region
        %s323 = ssub.s32 %s16, 1
        // Predicated region
        $region49: #{flow_matching_loss.1} parent=47 // pred_check
          %p324 = pneg %p49
        $region50: #{flow_matching_loss.1} parent=47 // pred_check_branch
          %326 = sbr.rel (%p324) target = $region52
        $region51: #{flow_matching_loss.1} parent=47 // pred_region
          %328 = dma.done [#allocation3], 16
        $region52: #{flow_matching_loss.1} parent=47 // pred_fallthru
          _
        %329 = sfence
        %p330 = pneg %p49
        %p331 = pneg %p46
        %s332 = sadd.s32 %s25, %s26
        %p333 = scmp.lt.s32.totalorder %s332, 1
        %s334 = scalar_select %p333, %s332, 1
        %s335 = smul.addr %s334, 8
        %s336 = scalar_lea.vmem %s1, %s335
        %p337 = pneg %p77
        %p338 = pneg %p74
        %s339 = sadd.s32 %s25, %s26
        %p340 = scmp.lt.s32.totalorder %s339, 1
        %s341 = scalar_select %p340, %s339, 1
        %s342 = smul.addr %s341, 8
        %s343 = scalar_lea.vmem %s2, %s342
        %p344 = pneg %p105
        %p345 = pneg %p102
        %s346 = sadd.s32 %s25, %s26
        %p347 = scmp.lt.s32.totalorder %s346, 1
        %s348 = scalar_select %p347, %s346, 1
        %s349 = smul.addr %s348, 8
        %s350 = scalar_lea.vmem %s3, %s349
        %p351 = pneg %p133
        %p352 = pneg %p130
        %p353 = pneg %p154
        %p354 = pneg %p151
        %p355 = pneg %p175
        %p356 = pneg %p172
        %p357 = pneg %p196
        %p358 = pneg %p193
        %p359 = pneg %p224
        %p360 = pneg %p221
        %p361 = scmp.lt.s32.totalorder %s25, 1
        %s362 = scalar_select %p361, %s25, 1
        %p363 = scmp.lt.s32.totalorder %s26, 0
        %s364 = scalar_select %p363, %s26, 0
        %s365 = sadd.s32 %s364, %s362
        %s366 = smul.addr %s365, 8
        %s367 = scalar_lea.vmem %s7, %s366
        %p368 = pneg %p252
        %p369 = pneg %p249
        %p370 = scmp.lt.s32.totalorder %s25, 1
        %s371 = scalar_select %p370, %s25, 1
        %p372 = scmp.lt.s32.totalorder %s26, 0
        %s373 = scalar_select %p372, %s26, 0
        %s374 = sadd.s32 %s373, %s371
        %s375 = smul.addr %s374, 8
        %s376 = scalar_lea.vmem %s8, %s375
        %s377 = sadd.s32 %s25, %s26
        %p378 = scmp.lt.s32.totalorder %s377, 1
        %s379 = scalar_select %p378, %s377, 1
        %s380 = smul.addr %s379, 8
        %s381 = scalar_lea.vmem %s1, %s380
        %s382 = sadd.s32 %s25, %s26
        %s383 = sadd.s32 %s25, %s26
        %p384 = scmp.lt.s32.totalorder %s383, 1
        %s385 = scalar_select %p384, %s383, 1
        %s386 = smul.addr %s385, 8
        %s387 = scalar_lea.vmem %s2, %s386
        %s388 = sadd.s32 %s25, %s26
        %s389 = sadd.s32 %s25, %s26
        %p390 = scmp.lt.s32.totalorder %s389, 1
        %s391 = scalar_select %p390, %s389, 1
        %s392 = smul.addr %s391, 8
        %s393 = scalar_lea.vmem %s3, %s392
        %s394 = sadd.s32 %s25, %s26
        %p395 = scmp.lt.s32.totalorder %s25, 1
        %s396 = scalar_select %p395, %s25, 1
        %p397 = scmp.lt.s32.totalorder %s26, 0
        %s398 = scalar_select %p397, %s26, 0
        %s399 = sadd.s32 %s398, %s396
        %s400 = smul.addr %s399, 8
        %s401 = scalar_lea.vmem %s7, %s400
        %p402 = scmp.lt.s32.totalorder %s25, 1
        %s403 = scalar_select %p402, %s25, 1
        %p404 = scmp.lt.s32.totalorder %s26, 0
        %s405 = scalar_select %p404, %s26, 0
        %s406 = sadd.s32 %s405, %s403
        %s407 = smul.addr %s406, 8
        %s408 = scalar_lea.vmem %s8, %s407
        %s409 = sld [smem:[#allocation2 + %s25]]
        %s410 = ssub.f32 1.0, %s409
        %s411 = smul.f32 %s409, 0.9999
        %s412 = sadd.f32 %s411, 0.0001
        %v413 = vld [vmem:[%s381] sm:$0xff]
        %v414 = vld [vmem:[%s387] sm:$0xff]
        %v415 = vld [vmem:[%s393] sm:$0xff]
        %v416 = vstv %s410
        %v417 = vmul.f32 %v416, %v413
        %v418 = vstv %s412
        %v419 = vmul.f32 %v418, %v414
        %v420 = vadd.f32 %v417, %v419
        %v421 = vmul.f32 %v414, 0.9999
        %v422 = vsub.f32 %v421, %v413
        %424 = vset.pattern.permute.xlu0 0
        %425 = vperm.xlu0 %424, %v415
        %v426 = vpop.permute.xlu0 %425
        %v428 = vmul.f32 %v422, %v426
        %v429 = vld [vmem:[%s5] sm:$0x1]
        %v430 = vld [vmem:[%s6] sm:$0x1]
        %v431 = vstv %s409
        %v432 = vmul.f32 %v431, %v430
        %v433 = vadd.f32 %v429, %v432
        %v434 = vpack.c.bf16 %v420, %v420
        %v435 = vld [vmem:[%s4] sm:$0xf]
        %v436 = vld [vmem:[%s4 + $0x4] sm:$0xf]
        %v437 = vld [vmem:[%s4 + $0x8] sm:$0xf]
        %v438 = vld [vmem:[%s4 + $0xc] sm:$0xf]
        %v439 = vld [vmem:[%s4 + $0x10] sm:$0xf]
        %v440 = vld [vmem:[%s4 + $0x14] sm:$0xf]
        %v441 = vld [vmem:[%s4 + $0x18] sm:$0xf]
        %v442 = vld [vmem:[%s4 + $0x1c] sm:$0xf]
        %v443 = vld [vmem:[%s4 + $0x20] sm:$0xf]
        %v444 = vld [vmem:[%s4 + $0x24] sm:$0xf]
        %v445 = vld [vmem:[%s4 + $0x28] sm:$0xf]
        %v446 = vld [vmem:[%s4 + $0x2c] sm:$0xf]
        %v447 = vld [vmem:[%s4 + $0x30] sm:$0xf]
        %v448 = vld [vmem:[%s4 + $0x34] sm:$0xf]
        %v449 = vld [vmem:[%s4 + $0x38] sm:$0xf]
        %v450 = vld [vmem:[%s4 + $0x3c] sm:$0xf]
        %v452 = vperm.slane %v433, 0
        %v470 = vunpack.c.l.b16 %v435
        %v471 = vunpack.c.l.b16 %v436
        %v472 = vunpack.c.l.b16 %v437
        %v473 = vunpack.c.l.b16 %v438
        %v474 = vunpack.c.l.b16 %v439
        %v475 = vunpack.c.l.b16 %v440
        %v476 = vunpack.c.l.b16 %v441
        %v477 = vunpack.c.l.b16 %v442
        %v478 = vunpack.c.l.b16 %v443
        %v479 = vunpack.c.l.b16 %v444
        %v480 = vunpack.c.l.b16 %v445
        %v481 = vunpack.c.l.b16 %v446
        %v482 = vunpack.c.l.b16 %v447
        %v483 = vunpack.c.l.b16 %v448
        %v484 = vunpack.c.l.b16 %v449
        %v485 = vunpack.c.l.b16 %v450
        %v486 = vpack.c.b16 %v471, %v470
        %v487 = vpack.c.b16 %v473, %v472
        %v488 = vpack.c.b16 %v475, %v474
        %v489 = vpack.c.b16 %v477, %v476
        %v490 = vpack.c.b16 %v479, %v478
        %v491 = vpack.c.b16 %v481, %v480
        %v492 = vpack.c.b16 %v483, %v482
        %v493 = vpack.c.b16 %v485, %v484
        %502 = vmatpush.bf16.msra.mxu0 %v493
        %503 = vmatpush.bf16.msra.mxu0 %v492
        %504 = vmatpush.bf16.msra.mxu0 %v491
        %505 = vmatpush.bf16.msra.mxu0 %v490
        %506 = vmatpush.bf16.msra.mxu0 %v489
        %507 = vmatpush.bf16.msra.mxu0 %v488
        %508 = vmatpush.bf16.msra.mxu0 %v487
        %509 = vmatpush.bf16.msra.mxu0 %v486
        %510 = vmatmul.bf16.gmra.mxu0 %v434
        %v511 = vpop.f32.mrf.mxu0
        %v512 = vadd.f32 %v452, %v511
        %v513 = vpop.f32.mrf.mxu0
        %514 = vdwg.mxu0
        %v515 = vmul.f32 %v512, %v426
        %s516 = scalar_lea.vmem %s5, 1
        %v517 = vld [vmem:[%s516] sm:$0x1]
        %s518 = scalar_lea.vmem %s6, 1
        %v519 = vld [vmem:[%s518] sm:$0x1]
        %v520 = vmul.f32 %v431, %v519
        %v521 = vadd.f32 %v517, %v520
        %v522 = vpack.c.bf16 %v515, %v515
        %s523 = scalar_lea.vmem %s4, 64
        %v524 = vld [vmem:[%s523] sm:$0xf]
        %v525 = vld [vmem:[%s523 + $0x4] sm:$0xf]
        %v526 = vld [vmem:[%s523 + $0x8] sm:$0xf]
        %v527 = vld [vmem:[%s523 + $0xc] sm:$0xf]
        %v528 = vld [vmem:[%s523 + $0x10] sm:$0xf]
        %v529 = vld [vmem:[%s523 + $0x14] sm:$0xf]
        %v530 = vld [vmem:[%s523 + $0x18] sm:$0xf]
        %v531 = vld [vmem:[%s523 + $0x1c] sm:$0xf]
        %v532 = vld [vmem:[%s523 + $0x20] sm:$0xf]
        %v533 = vld [vmem:[%s523 + $0x24] sm:$0xf]
        %v534 = vld [vmem:[%s523 + $0x28] sm:$0xf]
        %v535 = vld [vmem:[%s523 + $0x2c] sm:$0xf]
        %v536 = vld [vmem:[%s523 + $0x30] sm:$0xf]
        %v537 = vld [vmem:[%s523 + $0x34] sm:$0xf]
        %v538 = vld [vmem:[%s523 + $0x38] sm:$0xf]
        %v539 = vld [vmem:[%s523 + $0x3c] sm:$0xf]
        %v541 = vperm.slane %v521, 0
        %v559 = vunpack.c.l.b16 %v524
        %v560 = vunpack.c.l.b16 %v525
        %v561 = vunpack.c.l.b16 %v526
        %v562 = vunpack.c.l.b16 %v527
        %v563 = vunpack.c.l.b16 %v528
        %v564 = vunpack.c.l.b16 %v529
        %v565 = vunpack.c.l.b16 %v530
        %v566 = vunpack.c.l.b16 %v531
        %v567 = vunpack.c.l.b16 %v532
        %v568 = vunpack.c.l.b16 %v533
        %v569 = vunpack.c.l.b16 %v534
        %v570 = vunpack.c.l.b16 %v535
        %v571 = vunpack.c.l.b16 %v536
        %v572 = vunpack.c.l.b16 %v537
        %v573 = vunpack.c.l.b16 %v538
        %v574 = vunpack.c.l.b16 %v539
        %v575 = vpack.c.b16 %v560, %v559
        %v576 = vpack.c.b16 %v562, %v561
        %v577 = vpack.c.b16 %v564, %v563
        %v578 = vpack.c.b16 %v566, %v565
        %v579 = vpack.c.b16 %v568, %v567
        %v580 = vpack.c.b16 %v570, %v569
        %v581 = vpack.c.b16 %v572, %v571
        %v582 = vpack.c.b16 %v574, %v573
        %591 = vmatpush.bf16.msra.mxu0 %v582
        %592 = vmatpush.bf16.msra.mxu0 %v581
        %593 = vmatpush.bf16.msra.mxu0 %v580
        %594 = vmatpush.bf16.msra.mxu0 %v579
        %595 = vmatpush.bf16.msra.mxu0 %v578
        %596 = vmatpush.bf16.msra.mxu0 %v577
        %597 = vmatpush.bf16.msra.mxu0 %v576
        %598 = vmatpush.bf16.msra.mxu0 %v575
        %599 = vmatmul.bf16.gmra.mxu0 %v522
        %v600 = vpop.f32.mrf.mxu0
        %v601 = vadd.f32 %v541, %v600
        %v602 = vpop.f32.mrf.mxu0
        %603 = vdwg.mxu0
        %v604 = vmul.f32 %v601, %v426
        %v605 = vsub.f32 %v604, %v428
        %v606 = vmul.f32 %v605, %v605
        %607 = vadd.xlane.f32.xlu0 %v606
        %v608 = vpop.xlane.xlu0 %607
        %v609 = vrot.slane %v608, 4
        %v610 = vadd.f32 %v608, %v609
        %v611 = vrot.slane %v610, 2
        %v612 = vadd.f32 %v610, %v611
        %v613 = vrot.slane %v612, 1
        %v614 = vadd.f32 %v612, %v613
        %s615 = vtos %v614
        %vm616 = vcmask 7168
        %v617 = vsel %vm616, %v415, 0.0
        %618 = vadd.xlane.f32.xlu0 %v617
        %v619 = vpop.xlane.xlu0 %618
        %v620 = vrot.slane %v619, 4
        %v621 = vadd.f32 %v619, %v620
        %v622 = vrot.slane %v621, 2
        %v623 = vadd.f32 %v621, %v622
        %v624 = vrot.slane %v623, 1
        %v625 = vadd.f32 %v623, %v624
        %s626 = vtos %v625
        %v627 = vstv %s615
        %628 = vst [vmem:[%s401] sm:$0xff] %v627
        %v629 = vstv %s626
        %630 = vst [vmem:[%s408] sm:$0xff] %v629
        %p631 = scmp.lt.s32.totalorder %s25, 1
        %s632 = scalar_select %p631, %s25, 1
        %p633 = scmp.lt.s32.totalorder %s26, 0
        %s634 = scalar_select %p633, %s26, 0
        %s635 = sadd.s32 %s634, %s632
        %s636 = smul.addr %s635, 8
        %s637 = scalar_lea.vmem %s7, %s636
        %p638 = scmp.lt.s32.totalorder %s25, 1
        %s639 = scalar_select %p638, %s25, 1
        %p640 = scmp.lt.s32.totalorder %s26, 0
        %s641 = scalar_select %p640, %s26, 0
        %s642 = sadd.s32 %s641, %s639
        %s643 = smul.addr %s642, 8
        %s644 = scalar_lea.vmem %s8, %s643
        // Predicated region
        $region53: #{flow_matching_loss.1} parent=47 // pred_check
          %p645 = pneg %p221
        $region54: #{flow_matching_loss.1} parent=47 // pred_check_branch
          %647 = sbr.rel (%p645) target = $region56
        $region55: #{flow_matching_loss.1} parent=47 // pred_region
          _
        $region56: #{flow_matching_loss.1} parent=47 // pred_fallthru
          _
        // Predicated region
        $region57: #{flow_matching_loss.1} parent=47 // pred_check
          %p648 = pneg %p249
        $region58: #{flow_matching_loss.1} parent=47 // pred_check_branch
          %650 = sbr.rel (%p648) target = $region60
        $region59: #{flow_matching_loss.1} parent=47 // pred_region
          _
        $region60: #{flow_matching_loss.1} parent=47 // pred_fallthru
          _
      $region48: #{flow_matching_loss.1} parent=5 // pred_fallthru
        _
      %p651 = scmp.le.s32.totalorder 2, %s16
      // Predicated region
      $region61: #{flow_matching_loss.1} parent=5 // pred_check
        %p652 = pneg %p651
      $region62: #{flow_matching_loss.1} parent=5 // pred_check_branch
        %654 = sbr.rel (%p652) target = $region64
      $region63: #{flow_matching_loss.1} parent=5 // pred_region
        %s655 = ssub.s32 %s16, 2
        // Predicated region
        $region65: #{flow_matching_loss.1} parent=63 // pred_check
          %p656 = pneg %p227
        $region66: #{flow_matching_loss.1} parent=63 // pred_check_branch
          %658 = sbr.rel (%p656) target = $region68
        $region67: #{flow_matching_loss.1} parent=63 // pred_region
          %p659 = scmp.lt.s32.totalorder %s27, 1
          %s660 = scalar_select %p659, %s27, 1
          %p661 = scmp.lt.s32.totalorder %s28, 0
          %s662 = scalar_select %p661, %s28, 0
          %s663 = sadd.s32 %s662, %s660
          %s664 = smul.addr %s663, 8
          %s665 = scalar_lea.vmem %s7, %s664
        $region68: #{flow_matching_loss.1} parent=63 // pred_fallthru
          _
        // Predicated region
        $region69: #{flow_matching_loss.1} parent=63 // pred_check
          %p666 = pneg %p255
        $region70: #{flow_matching_loss.1} parent=63 // pred_check_branch
          %668 = sbr.rel (%p666) target = $region72
        $region71: #{flow_matching_loss.1} parent=63 // pred_region
          %p669 = scmp.lt.s32.totalorder %s27, 1
          %s670 = scalar_select %p669, %s27, 1
          %p671 = scmp.lt.s32.totalorder %s28, 0
          %s672 = scalar_select %p671, %s28, 0
          %s673 = sadd.s32 %s672, %s670
          %s674 = smul.addr %s673, 8
          %s675 = scalar_lea.vmem %s8, %s674
        $region72: #{flow_matching_loss.1} parent=63 // pred_fallthru
          _
      $region64: #{flow_matching_loss.1} parent=5 // pred_fallthru
        _
    $region6: #{flow_matching_loss.1} parent=1 // loop_footer
      %s20 = sadd.s32 1, %s16
    $region7: #{flow_matching_loss.1} parent=1 // loop_footer_branch
      %15 = sbr.rel target = $region3
    $region8: #{flow_matching_loss.1} parent=1 // loop_exit
      _
    %676 = vsyncpa [#allocation3], 1
    %s677 = scalar_lea.sflag [#allocation3], 1
    %678 = vsyncpa %s677, 1

</llo_original>
